<compile_context>
chip_gen: v7x
topology: tpu7x:2x2x1
jax: 0.10.0
libtpu: 0.0.40
codegen_flags: <defaults>
</compile_context>

<pallas_src>
from functools import partial

import jax
import jax.numpy as jnp
from jax.experimental import pallas as pl
from jax.experimental.pallas import tpu as pltpu

GAMMA = 0.99


def _round_up(n, m):
    return (n + m - 1) // m * m


def _num_tensorcores_per_chip():
    """1 TC on v5e/v6e, 2 TCs on v7x.  Conservative fallback: 1."""
    try:
        kind = jax.devices()[0].device_kind.lower()
        if "v7" in kind:
            return 2
    except Exception:
        pass
    return 1


def _batch_tiles(B, max_block_b=1024):
    """Pick (tile, padded batch, grid) -- one block per TensorCore, as big as fits."""
    cores = _num_tensorcores_per_chip()
    per_core = pl.cdiv(B, cores) if cores > 1 else B
    TB = min(_round_up(per_core, 8), max_block_b)
    B_pad = _round_up(B, TB)
    return TB, B_pad, B_pad // TB


# ----------------------------------------------------------------------------
# Kernels
# ----------------------------------------------------------------------------
def _mlp_q(x, w1_ref, b1_ref, w2_ref, b2_ref, w3_ref, b3_ref):
    """fc1 -> ReLU -> fc2 -> ReLU -> fc3, all on the MXU with f32 accumulation."""
    h1 = jnp.maximum(
        jnp.dot(x, w1_ref[...], preferred_element_type=jnp.float32) + b1_ref[...], 0.0)
    h2 = jnp.maximum(
        jnp.dot(h1, w2_ref[...], preferred_element_type=jnp.float32) + b2_ref[...], 0.0)
    return jnp.dot(h2, w3_ref[...], preferred_element_type=jnp.float32) + b3_ref[...]


def _dqn_fwd_kernel(x_ref, w1_ref, b1_ref, w2_ref, b2_ref, w3_ref, b3_ref,
                    q_ref, act_ref, *, num_actions):
    """Forward pass + fused greedy-argmax epilogue."""
    q = _mlp_q(x_ref[...], w1_ref, b1_ref, w2_ref, b2_ref, w3_ref, b3_ref)
    q_ref[...] = q.astype(q_ref.dtype)           # lane-dense (TB, 128) store

    if num_actions == 2:                         # trace-time fast path (CartPole)
        # ties -> action 0, matching torch.argmax first-max-index semantics.
        act_ref[...] = (q[:, 1:2] > q[:, 0:1]).astype(jnp.int32)
    else:
        col = jax.lax.broadcasted_iota(jnp.int32, q.shape, 1)
        valid = col < num_actions
        qm = jnp.where(valid, q, -jnp.inf)
        qmax = jnp.max(qm, axis=1, keepdims=True)
        idxf = jnp.where(valid & (qm >= qmax),
                         col.astype(jnp.float32), jnp.float32(q.shape[1]))
        act_ref[...] = jnp.min(idxf, axis=1, keepdims=True).astype(jnp.int32)


def _dqn_td_target_kernel(ns_ref, r_ref, d_ref,
                          w1_ref, b1_ref, w2_ref, b2_ref, w3_ref, b3_ref,
                          tgt_ref, *, num_actions, gamma):
    """Fused target-network forward + TD target: gamma*(1-done)*max_a Q(s') + r."""
    q = _mlp_q(ns_ref[...], w1_ref, b1_ref, w2_ref, b2_ref, w3_ref, b3_ref)
    if num_actions == 2:
        qmax = jnp.maximum(q[:, 0:1], q[:, 1:2])
    else:
        col = jax.lax.broadcasted_iota(jnp.int32, q.shape, 1)
        qm = jnp.where(col < num_actions, q, -jnp.inf)
        qmax = jnp.max(qm, axis=1, keepdims=True)
    tgt_ref[...] = gamma * (1.0 - d_ref[...]) * qmax + r_ref[...]


# ----------------------------------------------------------------------------
# Host-side wrappers
# ----------------------------------------------------------------------------
def prepare_params(params):
    """Pad weights/biases ONCE to sublane/lane-aligned shapes (S->8, H/A->128)."""
    w1, b1, w2, b2, w3, b3 = params
    S, H = w1.shape
    A = w3.shape[1]
    SP = _round_up(S, 8)
    HP = _round_up(H, 128)
    AP = _round_up(A, 128)

    def pad2(a, rows, cols):
        a = a if a.ndim == 2 else a.reshape(1, -1)
        return jnp.pad(a, ((0, rows - a.shape[0]), (0, cols - a.shape[1])))

    padded = (
        pad2(w1, SP, HP), pad2(b1, 1, HP),
        pad2(w2, HP, HP), pad2(b2, 1, HP),
        pad2(w3, HP, AP), pad2(b3, 1, AP),
    )
    return {"params": padded, "state_size": S, "hidden": H, "action_size": A}


def _weight_specs(SP, HP, AP):
    rep = lambda i: (0, 0)   # same (full) block for every batch tile
    return [
        pl.BlockSpec((SP, HP), rep),   # w1
        pl.BlockSpec((1, HP), rep),    # b1
        pl.BlockSpec((HP, HP), rep),   # w2
        pl.BlockSpec((1, HP), rep),    # b2
        pl.BlockSpec((HP, AP), rep),   # w3
        pl.BlockSpec((1, AP), rep),    # b3
    ]


def dqn_forward(x, prepared):
    """Fused Pallas forward.  x: (B, S) f32.  Returns (Q (B, A) f32, act (B,) i32)."""
    w1p, b1p, w2p, b2p, w3p, b3p = prepared["params"]
    A = prepared["action_size"]
    B, S = x.shape
    SP, HP = w1p.shape
    AP = w3p.shape[1]

    TB, B_pad, grid_b = _batch_tiles(B)
    x = jnp.pad(x, ((0, B_pad - B), (0, SP - S)))   # batch + feature pad (4 -> 8)

    q_pad, act_pad = pl.pallas_call(
        partial(_dqn_fwd_kernel, num_actions=A),
        grid=(grid_b,),
        in_specs=[pl.BlockSpec((TB, SP), lambda i: (i, 0))] + _weight_specs(SP, HP, AP),
        out_specs=(
            pl.BlockSpec((TB, AP), lambda i: (i, 0)),   # padded lane-dense Q
            pl.BlockSpec((TB, 1), lambda i: (i, 0)),    # greedy action
        ),
        out_shape=(
            jax.ShapeDtypeStruct((B_pad, AP), jnp.float32),
            jax.ShapeDtypeStruct((B_pad, 1), jnp.int32),
        ),
        compiler_params=pltpu.CompilerParams(
            dimension_semantics=("parallel",)),
    )(x, w1p, b1p, w2p, b2p, w3p, b3p)

    return q_pad[:B, :A], act_pad[:B, 0]


def dqn_td_target(new_states, rewards, dones, prepared_target, *, gamma=GAMMA):
    """Fused target step of Model.train(): gamma*(1-done)*max_a Q_target(s') + r."""
    w1p, b1p, w2p, b2p, w3p, b3p = prepared_target["params"]
    A = prepared_target["action_size"]
    B, S = new_states.shape
    SP, HP = w1p.shape
    AP = w3p.shape[1]

    TB, B_pad, grid_b = _batch_tiles(B)
    ns = jnp.pad(new_states, ((0, B_pad - B), (0, SP - S)))
    r = jnp.pad(rewards.reshape(B, 1).astype(jnp.float32), ((0, B_pad - B), (0, 0)))
    d = jnp.pad(dones.reshape(B, 1).astype(jnp.float32), ((0, B_pad - B), (0, 0)))

    tgt = pl.pallas_call(
        partial(_dqn_td_target_kernel, num_actions=A, gamma=float(gamma)),
        grid=(grid_b,),
        in_specs=[
            pl.BlockSpec((TB, SP), lambda i: (i, 0)),   # new states
            pl.BlockSpec((TB, 1), lambda i: (i, 0)),    # rewards
            pl.BlockSpec((TB, 1), lambda i: (i, 0)),    # dones
        ] + _weight_specs(SP, HP, AP),
        out_specs=pl.BlockSpec((TB, 1), lambda i: (i, 0)),
        out_shape=jax.ShapeDtypeStruct((B_pad, 1), jnp.float32),
        compiler_params=pltpu.CompilerParams(
            dimension_semantics=("parallel",)),
    )(ns, r, d, w1p, b1p, w2p, b2p, w3p, b3p)

    return tgt[:B, 0]


# ----------------------------------------------------------------------------
# Reference / init
# ----------------------------------------------------------------------------
def init_params(key, state_size, action_size, hidden=50):
    """Deterministic init matching PyTorch nn.Linear default (U[-1/sqrt(fan_in), +])."""
    def linear(k, fan_in, fan_out):
        kw, kb = jax.random.split(k)
        bound = 1.0 / jnp.sqrt(float(fan_in))
        w = jax.random.uniform(kw, (fan_in, fan_out), jnp.float32, -bound, bound)
        b = jax.random.uniform(kb, (1, fan_out), jnp.float32, -bound, bound)
        return w, b

    k1, k2, k3 = jax.random.split(key, 3)
    w1, b1 = linear(k1, state_size, hidden)
    w2, b2 = linear(k2, hidden, hidden)
    w3, b3 = linear(k3, hidden, action_size)
    return (w1, b1, w2, b2, w3, b3)


def reference_forward(x, params):
    """Plain-JAX reference for correctness check."""
    w1, b1, w2, b2, w3, b3 = params
    h1 = jnp.maximum(x @ w1 + b1, 0.0)
    h2 = jnp.maximum(h1 @ w2 + b2, 0.0)
    return h2 @ w3 + b3


if __name__ == "__main__":
    STATE_SIZE = 4     # CartPole-v0 observation dim
    ACTION_SIZE = 2    # CartPole-v0 action count
    HIDDEN = 50
    BATCH = 256        # realistic replay-batch size (amortizes launch overhead)

    key = jax.random.PRNGKey(0)
    k_p, k_tp, k_x, k_ns, k_r, k_d = jax.random.split(key, 6)

    params = init_params(k_p, STATE_SIZE, ACTION_SIZE, HIDDEN)
    target_params = init_params(k_tp, STATE_SIZE, ACTION_SIZE, HIDDEN)

    x = jax.random.normal(k_x, (BATCH, STATE_SIZE), jnp.float32)
    new_states = jax.random.normal(k_ns, (BATCH, STATE_SIZE), jnp.float32)
    rewards = jax.random.uniform(k_r, (BATCH,), jnp.float32)
    dones = (jax.random.uniform(k_d, (BATCH,)) < 0.1).astype(jnp.float32)

    prepared = prepare_params(params)            # pad weights/biases once
    prepared_t = prepare_params(target_params)

    fwd = jax.jit(lambda xb: dqn_forward(xb, prepared))
    td = jax.jit(lambda ns, r, d: dqn_td_target(ns, r, d, prepared_t))

    q, act = fwd(x)
    q = jax.block_until_ready(q)
    act = jax.block_until_ready(act)
    tgt = jax.block_until_ready(td(new_states, rewards, dones))

    # --- correctness vs. plain-JAX f32 reference (1e-4 tolerance: TPU-default
    # --- matmul precision; pass precision=HIGHEST if exact parity is needed).
    ref_q = reference_forward(x, params)
    assert q.shape == (BATCH, ACTION_SIZE), q.shape
    assert act.shape == (BATCH,), act.shape
    assert jnp.allclose(q, ref_q, atol=1e-4, rtol=1e-4), "Q mismatch vs reference"

    picked = jnp.take_along_axis(ref_q, act[:, None].astype(jnp.int32), axis=1)[:, 0]
    assert jnp.all(picked >= ref_q.max(axis=1) - 1e-4), "action mismatch vs reference"

    ref_qn = reference_forward(new_states, target_params)
    ref_tgt = GAMMA * (1.0 - dones) * ref_qn.max(axis=1) + rewards
    assert tgt.shape == (BATCH,), tgt.shape
    assert jnp.allclose(tgt, ref_tgt, atol=1e-4, rtol=1e-4), "TD target mismatch"

    print("KERNEL_OK")
</pallas_src>

<mosaic_0001>
module attributes {stable_mosaic.version = 11 : i64} {
  func.func @_dqn_fwd_kernel(%arg0: i32, %arg1: memref<256x8xf32, #tpu.memory_space<vmem>>, %arg2: memref<8x128xf32, #tpu.memory_space<vmem>>, %arg3: memref<1x128xf32, #tpu.memory_space<vmem>>, %arg4: memref<128x128xf32, #tpu.memory_space<vmem>>, %arg5: memref<1x128xf32, #tpu.memory_space<vmem>>, %arg6: memref<128x128xf32, #tpu.memory_space<vmem>>, %arg7: memref<1x128xf32, #tpu.memory_space<vmem>>, %arg8: memref<256x128xf32, #tpu.memory_space<vmem>>, %arg9: memref<256x1xi32, #tpu.memory_space<vmem>>) attributes {dimension_semantics = [#tpu.dimension_semantics<parallel>], iteration_bounds = array<i64: 1>, scalar_prefetch = 0 : i64, scratch_operands = 0 : i64, tpu.core_type = #tpu.core_type<tc>, window_params = [{transform_indices = @transform_0, window_bounds = array<i64: 256, 8>}, {pipeline_mode = #tpu.pipeline_mode<synchronous>, transform_indices = @transform_1, window_bounds = array<i64: 8, 128>}, {pipeline_mode = #tpu.pipeline_mode<synchronous>, transform_indices = @transform_2, window_bounds = array<i64: 1, 128>}, {pipeline_mode = #tpu.pipeline_mode<synchronous>, transform_indices = @transform_3, window_bounds = array<i64: 128, 128>}, {pipeline_mode = #tpu.pipeline_mode<synchronous>, transform_indices = @transform_4, window_bounds = array<i64: 1, 128>}, {pipeline_mode = #tpu.pipeline_mode<synchronous>, transform_indices = @transform_5, window_bounds = array<i64: 128, 128>}, {pipeline_mode = #tpu.pipeline_mode<synchronous>, transform_indices = @transform_6, window_bounds = array<i64: 1, 128>}, {transform_indices = @transform_7, window_bounds = array<i64: 256, 128>}, {transform_indices = @transform_8, window_bounds = array<i64: 256, 1>}]} {
    %c0 = arith.constant 0 : index
    %c0_0 = arith.constant 0 : index
    %0 = vector.load %arg1[%c0, %c0_0] : memref<256x8xf32, #tpu.memory_space<vmem>>, vector<256x8xf32>
    %c0_1 = arith.constant 0 : index
    %c0_2 = arith.constant 0 : index
    %1 = vector.load %arg2[%c0_1, %c0_2] : memref<8x128xf32, #tpu.memory_space<vmem>>, vector<8x128xf32>
    %cst = arith.constant dense<0.000000e+00> : vector<256x128xf32>
    %2 = tpu.matmul %0, %1, %cst {dimension_numbers = #tpu.dot_dimension_numbers<[1], [0], [0], [1], [0, 0, 1, 1], [], []>} : vector<256x8xf32>, vector<8x128xf32>, vector<256x128xf32> -> vector<256x128xf32>
    %c0_3 = arith.constant 0 : index
    %c0_4 = arith.constant 0 : index
    %3 = vector.load %arg3[%c0_3, %c0_4] : memref<1x128xf32, #tpu.memory_space<vmem>>, vector<1x128xf32>
    %4 = vector.broadcast %3 : vector<1x128xf32> to vector<256x128xf32>
    %5 = arith.addf %2, %4 : vector<256x128xf32>
    %cst_5 = arith.constant 0.000000e+00 : f32
    %6 = vector.broadcast %cst_5 : f32 to vector<256x128xf32>
    %7 = arith.maximumf %5, %6 : vector<256x128xf32>
    %c0_6 = arith.constant 0 : index
    %c0_7 = arith.constant 0 : index
    %8 = vector.load %arg4[%c0_6, %c0_7] : memref<128x128xf32, #tpu.memory_space<vmem>>, vector<128x128xf32>
    %cst_8 = arith.constant dense<0.000000e+00> : vector<256x128xf32>
    %9 = tpu.matmul %7, %8, %cst_8 {dimension_numbers = #tpu.dot_dimension_numbers<[1], [0], [0], [1], [0, 0, 1, 1], [], []>} : vector<256x128xf32>, vector<128x128xf32>, vector<256x128xf32> -> vector<256x128xf32>
    %c0_9 = arith.constant 0 : index
    %c0_10 = arith.constant 0 : index
    %10 = vector.load %arg5[%c0_9, %c0_10] : memref<1x128xf32, #tpu.memory_space<vmem>>, vector<1x128xf32>
    %11 = vector.broadcast %10 : vector<1x128xf32> to vector<256x128xf32>
    %12 = arith.addf %9, %11 : vector<256x128xf32>
    %cst_11 = arith.constant 0.000000e+00 : f32
    %13 = vector.broadcast %cst_11 : f32 to vector<256x128xf32>
    %14 = arith.maximumf %12, %13 : vector<256x128xf32>
    %c0_12 = arith.constant 0 : index
    %c0_13 = arith.constant 0 : index
    %15 = vector.load %arg6[%c0_12, %c0_13] : memref<128x128xf32, #tpu.memory_space<vmem>>, vector<128x128xf32>
    %cst_14 = arith.constant dense<0.000000e+00> : vector<256x128xf32>
    %16 = tpu.matmul %14, %15, %cst_14 {dimension_numbers = #tpu.dot_dimension_numbers<[1], [0], [0], [1], [0, 0, 1, 1], [], []>} : vector<256x128xf32>, vector<128x128xf32>, vector<256x128xf32> -> vector<256x128xf32>
    %c0_15 = arith.constant 0 : index
    %c0_16 = arith.constant 0 : index
    %17 = vector.load %arg7[%c0_15, %c0_16] : memref<1x128xf32, #tpu.memory_space<vmem>>, vector<1x128xf32>
    %18 = vector.broadcast %17 : vector<1x128xf32> to vector<256x128xf32>
    %19 = arith.addf %16, %18 : vector<256x128xf32>
    %c0_17 = arith.constant 0 : index
    %c0_18 = arith.constant 0 : index
    %20 = vector.load %arg8[%c0_17, %c0_18] : memref<256x128xf32, #tpu.memory_space<vmem>>, vector<256x128xf32>
    tpu.vector_store %arg8[%c0_17, %c0_18], %19 {strides = array<i32>} : memref<256x128xf32, #tpu.memory_space<vmem>>, vector<256x128xf32>,
    %21 = vector.extract_strided_slice %19 {offsets = [0, 1], sizes = [256, 1], strides = [1, 1]} : vector<256x128xf32> to vector<256x1xf32>
    %22 = vector.extract_strided_slice %19 {offsets = [0, 0], sizes = [256, 1], strides = [1, 1]} : vector<256x128xf32> to vector<256x1xf32>
    %23 = arith.cmpf ogt, %21, %22 : vector<256x1xf32>
    %24 = arith.extui %23 : vector<256x1xi1> to vector<256x1xi32>
    %c0_19 = arith.constant 0 : index
    %c0_20 = arith.constant 0 : index
    %25 = vector.load %arg9[%c0_19, %c0_20] : memref<256x1xi32, #tpu.memory_space<vmem>>, vector<256x1xi32>
    tpu.vector_store %arg9[%c0_19, %c0_20], %24 {strides = array<i32>} : memref<256x1xi32, #tpu.memory_space<vmem>>, vector<256x1xi32>,
    return
  }
  func.func @transform_0(%arg0: i32) -> (i32, i32) {
    %c0_i32 = arith.constant 0 : i32
    %c0_i32_0 = arith.constant 0 : i32
    return %arg0, %c0_i32 : i32, i32
  }
  func.func @transform_1(%arg0: i32) -> (i32, i32) {
    %c0_i32 = arith.constant 0 : i32
    %c0_i32_0 = arith.constant 0 : i32
    %c0_i32_1 = arith.constant 0 : i32
    return %c0_i32, %c0_i32_0 : i32, i32
  }
  func.func @transform_2(%arg0: i32) -> (i32, i32) {
    %c0_i32 = arith.constant 0 : i32
    %c0_i32_0 = arith.constant 0 : i32
    %c0_i32_1 = arith.constant 0 : i32
    return %c0_i32, %c0_i32_0 : i32, i32
  }
  func.func @transform_3(%arg0: i32) -> (i32, i32) {
    %c0_i32 = arith.constant 0 : i32
    %c0_i32_0 = arith.constant 0 : i32
    %c0_i32_1 = arith.constant 0 : i32
    return %c0_i32, %c0_i32_0 : i32, i32
  }
  func.func @transform_4(%arg0: i32) -> (i32, i32) {
    %c0_i32 = arith.constant 0 : i32
    %c0_i32_0 = arith.constant 0 : i32
    %c0_i32_1 = arith.constant 0 : i32
    return %c0_i32, %c0_i32_0 : i32, i32
  }
  func.func @transform_5(%arg0: i32) -> (i32, i32) {
    %c0_i32 = arith.constant 0 : i32
    %c0_i32_0 = arith.constant 0 : i32
    %c0_i32_1 = arith.constant 0 : i32
    return %c0_i32, %c0_i32_0 : i32, i32
  }
  func.func @transform_6(%arg0: i32) -> (i32, i32) {
    %c0_i32 = arith.constant 0 : i32
    %c0_i32_0 = arith.constant 0 : i32
    %c0_i32_1 = arith.constant 0 : i32
    return %c0_i32, %c0_i32_0 : i32, i32
  }
  func.func @transform_7(%arg0: i32) -> (i32, i32) {
    %c0_i32 = arith.constant 0 : i32
    %c0_i32_0 = arith.constant 0 : i32
    return %arg0, %c0_i32 : i32, i32
  }
  func.func @transform_8(%arg0: i32) -> (i32, i32) {
    %c0_i32 = arith.constant 0 : i32
    %c0_i32_0 = arith.constant 0 : i32
    return %arg0, %c0_i32 : i32, i32
  }
}

</mosaic_0001>

<llo_original>
// kernel: _lambda_.1
$region0: #{_lambda_.1}
  #allocation0 [shape = 'u32[]', space=smem, size = 0x4, offset = 0x4, fixed_abs, tag = 'smem constant byte address 0x4 - core index']
  #allocation1 [shape = 'u32[144,128]{1,0:T(1,128)}', space=vmem, size = 0x12000, scoped, tag = 'internal scratch']
  %s0 = inlined_call_operand.vmem [shape: f32[256,8], index: 0, kind: input, shape index: {}]
  %s1 = inlined_call_operand.vmem [shape: f32[8,128], index: 1, kind: input, shape index: {}]
  %s2 = inlined_call_operand.vmem [shape: f32[1,128], index: 2, kind: input, shape index: {}]
  %s3 = inlined_call_operand.vmem [shape: f32[128,128], index: 3, kind: input, shape index: {}]
  %s4 = inlined_call_operand.vmem [shape: f32[1,128], index: 4, kind: input, shape index: {}]
  %s5 = inlined_call_operand.vmem [shape: f32[128,128], index: 5, kind: input, shape index: {}]
  %s6 = inlined_call_operand.vmem [shape: f32[1,128], index: 6, kind: input, shape index: {}]
  %s7 = inlined_call_operand.vmem [shape: f32[256,128], index: 7, kind: output, shape index: {0}]
  %s8 = inlined_call_operand.vmem [shape: s32[256,1], index: 8, kind: output, shape index: {1}]
  %9 = xla_tuple %s7, %s8
  %s10 = sld [smem:[#allocation0]]
  $region46: #{_lambda_.1} parent=0
    _
  %s12 = ssub.s32 1, %s10
  %s13 = scalar_select 0, %s12, %s10
  // Predicated region
  $region2: #{_lambda_.1} parent=0 // pred_check
    _
  $region3: #{_lambda_.1} parent=0 // pred_check_branch
    %15 = sbr.rel (0) target = $region5
  $region4: #{_lambda_.1} parent=0 // pred_region
    _
  $region5: #{_lambda_.1} parent=0 // pred_fallthru
    _
  // Predicated region
  $region6: #{_lambda_.1} parent=0 // pred_check
    _
  $region7: #{_lambda_.1} parent=0 // pred_check_branch
    %17 = sbr.rel (0) target = $region9
  $region8: #{_lambda_.1} parent=0 // pred_region
    _
  $region9: #{_lambda_.1} parent=0 // pred_fallthru
    _
  // Predicated region
  $region10: #{_lambda_.1} parent=0 // pred_check
    _
  $region11: #{_lambda_.1} parent=0 // pred_check_branch
    %19 = sbr.rel (0) target = $region13
  $region12: #{_lambda_.1} parent=0 // pred_region
    _
  $region13: #{_lambda_.1} parent=0 // pred_fallthru
    _
  // Predicated region
  $region14: #{_lambda_.1} parent=0 // pred_check
    _
  $region15: #{_lambda_.1} parent=0 // pred_check_branch
    %21 = sbr.rel (0) target = $region17
  $region16: #{_lambda_.1} parent=0 // pred_region
    _
  $region17: #{_lambda_.1} parent=0 // pred_fallthru
    _
  // Predicated region
  $region18: #{_lambda_.1} parent=0 // pred_check
    _
  $region19: #{_lambda_.1} parent=0 // pred_check_branch
    %23 = sbr.rel (0) target = $region21
  $region20: #{_lambda_.1} parent=0 // pred_region
    _
  $region21: #{_lambda_.1} parent=0 // pred_fallthru
    _
  // Predicated region
  $region22: #{_lambda_.1} parent=0 // pred_check
    _
  $region23: #{_lambda_.1} parent=0 // pred_check_branch
    %25 = sbr.rel (0) target = $region25
  $region24: #{_lambda_.1} parent=0 // pred_region
    _
  $region25: #{_lambda_.1} parent=0 // pred_fallthru
    _
  // Predicated region
  $region26: #{_lambda_.1} parent=0 // pred_check
    _
  $region27: #{_lambda_.1} parent=0 // pred_check_branch
    %27 = sbr.rel (0) target = $region29
  $region28: #{_lambda_.1} parent=0 // pred_region
    _
  $region29: #{_lambda_.1} parent=0 // pred_fallthru
    _
  %v28 = vld [vmem:[%s0] sm:$0xff]
  %v29 = vld [vmem:[%s0 + $0x8] sm:$0xff]
  %v30 = vld [vmem:[%s0 + $0x10] sm:$0xff]
  %v31 = vld [vmem:[%s0 + $0x18] sm:$0xff]
  %v32 = vld [vmem:[%s0 + $0x20] sm:$0xff]
  %v33 = vld [vmem:[%s0 + $0x28] sm:$0xff]
  %v34 = vld [vmem:[%s0 + $0x30] sm:$0xff]
  %v35 = vld [vmem:[%s0 + $0x38] sm:$0xff]
  %v36 = vld [vmem:[%s0 + $0x40] sm:$0xff]
  %v37 = vld [vmem:[%s0 + $0x48] sm:$0xff]
  %v38 = vld [vmem:[%s0 + $0x50] sm:$0xff]
  %v39 = vld [vmem:[%s0 + $0x58] sm:$0xff]
  %v40 = vld [vmem:[%s0 + $0x60] sm:$0xff]
  %v41 = vld [vmem:[%s0 + $0x68] sm:$0xff]
  %v42 = vld [vmem:[%s0 + $0x70] sm:$0xff]
  %v43 = vld [vmem:[%s0 + $0x78] sm:$0xff]
  %v44 = vld [vmem:[%s0 + $0x80] sm:$0xff]
  %v45 = vld [vmem:[%s0 + $0x88] sm:$0xff]
  %v46 = vld [vmem:[%s0 + $0x90] sm:$0xff]
  %v47 = vld [vmem:[%s0 + $0x98] sm:$0xff]
  %v48 = vld [vmem:[%s0 + $0xa0] sm:$0xff]
  %v49 = vld [vmem:[%s0 + $0xa8] sm:$0xff]
  %v50 = vld [vmem:[%s0 + $0xb0] sm:$0xff]
  %v51 = vld [vmem:[%s0 + $0xb8] sm:$0xff]
  %v52 = vld [vmem:[%s0 + $0xc0] sm:$0xff]
  %v53 = vld [vmem:[%s0 + $0xc8] sm:$0xff]
  %v54 = vld [vmem:[%s0 + $0xd0] sm:$0xff]
  %v55 = vld [vmem:[%s0 + $0xd8] sm:$0xff]
  %v56 = vld [vmem:[%s0 + $0xe0] sm:$0xff]
  %v57 = vld [vmem:[%s0 + $0xe8] sm:$0xff]
  %v58 = vld [vmem:[%s0 + $0xf0] sm:$0xff]
  %v59 = vld [vmem:[%s0 + $0xf8] sm:$0xff]
  %v60 = vld [vmem:[%s1] sm:$0xff]
  %v61 = vld [vmem:[%s2] sm:$0x1]
  %v63 = vlaneseq
  %v64 = vshrl.u32 %v63, 7
  %v65 = vsub.s32 0, %v64
  %v66 = vrot.slane %v61, %v65
  %vm68 = vcmask 64512
  %v70 = vsel %vm68, %v28, 0
  %v73 = vsel %vm68, %v29, 0
  %v76 = vsel %vm68, %v30, 0
  %v79 = vsel %vm68, %v31, 0
  %v82 = vsel %vm68, %v32, 0
  %v85 = vsel %vm68, %v33, 0
  %v88 = vsel %vm68, %v34, 0
  %v91 = vsel %vm68, %v35, 0
  %v94 = vsel %vm68, %v36, 0
  %v97 = vsel %vm68, %v37, 0
  %v100 = vsel %vm68, %v38, 0
  %v103 = vsel %vm68, %v39, 0
  %v106 = vsel %vm68, %v40, 0
  %v109 = vsel %vm68, %v41, 0
  %v112 = vsel %vm68, %v42, 0
  %v115 = vsel %vm68, %v43, 0
  %v118 = vsel %vm68, %v44, 0
  %v121 = vsel %vm68, %v45, 0
  %v124 = vsel %vm68, %v46, 0
  %v127 = vsel %vm68, %v47, 0
  %v130 = vsel %vm68, %v48, 0
  %v133 = vsel %vm68, %v49, 0
  %v136 = vsel %vm68, %v50, 0
  %v139 = vsel %vm68, %v51, 0
  %v142 = vsel %vm68, %v52, 0
  %v145 = vsel %vm68, %v53, 0
  %v148 = vsel %vm68, %v54, 0
  %v151 = vsel %vm68, %v55, 0
  %v154 = vsel %vm68, %v56, 0
  %v157 = vsel %vm68, %v57, 0
  %v160 = vsel %vm68, %v58, 0
  %v163 = vsel %vm68, %v59, 0
  %165 = vmatprep.subr.mxu0 0.0
  %166 = vmatpush1.msra.mxu0 %v60
  %167 = vmatprep.subr.mxu0 0.0
  %168 = vmatpush1.msra.mxu0 0.0
  %169 = vmatprep.subr.mxu0 0.0
  %170 = vmatpush1.msra.mxu0 0.0
  %171 = vmatprep.subr.mxu0 0.0
  %172 = vmatpush1.msra.mxu0 0.0
  %173 = vmatprep.subr.mxu0 0.0
  %174 = vmatpush1.msra.mxu0 0.0
  %175 = vmatprep.subr.mxu0 0.0
  %176 = vmatpush1.msra.mxu0 0.0
  %177 = vmatprep.subr.mxu0 0.0
  %178 = vmatpush1.msra.mxu0 0.0
  %179 = vmatprep.subr.mxu0 0.0
  %180 = vmatpush1.msra.mxu0 0.0
  %181 = vmatprep.subr.mxu0 0.0
  %182 = vmatpush1.msra.mxu0 0.0
  %183 = vmatprep.subr.mxu0 0.0
  %184 = vmatpush1.msra.mxu0 0.0
  %185 = vmatprep.subr.mxu0 0.0
  %186 = vmatpush1.msra.mxu0 0.0
  %187 = vmatprep.subr.mxu0 0.0
  %188 = vmatpush1.msra.mxu0 0.0
  %189 = vmatprep.subr.mxu0 0.0
  %190 = vmatpush1.msra.mxu0 0.0
  %191 = vmatprep.subr.mxu0 0.0
  %192 = vmatpush1.msra.mxu0 0.0
  %193 = vmatprep.subr.mxu0 0.0
  %194 = vmatpush1.msra.mxu0 0.0
  %195 = vmatprep.subr.mxu0 0.0
  %196 = vmatpush1.msra.mxu0 0.0
  %197 = vmatprep.subr.mxu0 0.0
  %198 = vmatpush1.msra.mxu0 0.0
  %199 = vmatprep.subr.mxu0 0.0
  %200 = vmatpush1.msra.mxu0 0.0
  %201 = vmatprep.subr.mxu0 0.0
  %202 = vmatpush1.msra.mxu0 0.0
  %203 = vmatprep.subr.mxu0 0.0
  %204 = vmatpush1.msra.mxu0 0.0
  %205 = vmatprep.subr.mxu0 0.0
  %206 = vmatpush1.msra.mxu0 0.0
  %207 = vmatprep.subr.mxu0 0.0
  %208 = vmatpush1.msra.mxu0 0.0
  %209 = vmatprep.subr.mxu0 0.0
  %210 = vmatpush1.msra.mxu0 0.0
  %211 = vmatprep.subr.mxu0 0.0
  %212 = vmatpush1.msra.mxu0 0.0
  %213 = vmatprep.subr.mxu0 0.0
  %214 = vmatpush1.msra.mxu0 0.0
  %215 = vmatprep.subr.mxu0 0.0
  %216 = vmatpush1.msra.mxu0 0.0
  %217 = vmatprep.subr.mxu0 0.0
  %218 = vmatpush1.msra.mxu0 0.0
  %219 = vmatprep.subr.mxu0 0.0
  %220 = vmatpush1.msra.mxu0 0.0
  %221 = vmatprep.subr.mxu0 0.0
  %222 = vmatpush1.msra.mxu0 0.0
  %223 = vmatprep.subr.mxu0 0.0
  %224 = vmatpush1.msra.mxu0 0.0
  %225 = vmatprep.subr.mxu0 0.0
  %226 = vmatpush1.msra.mxu0 0.0
  %227 = vmatprep.subr.mxu0 0.0
  %228 = vmatpush1.msra.mxu0 0.0
  %229 = vmatprep.mubr.f32.mxu0 0.0
  %230 = vmatmul.mubr.f32.gmra.mrb[0].mxu0 %v70
  %v231 = vpop.f32.mrb[0].mxu0
  %v232 = vadd.f32 %v66, %v231
  %v233 = vpop.f32.mrb[0].mxu0
  %234 = vmatprep.mubr.f32.mxu0 0.0
  %235 = vmatmul.mubr.f32.gmra.mrb[0].mxu0 %v73
  %v236 = vpop.f32.mrb[0].mxu0
  %v237 = vadd.f32 %v66, %v236
  %v238 = vpop.f32.mrb[0].mxu0
  %239 = vmatprep.mubr.f32.mxu0 0.0
  %240 = vmatmul.mubr.f32.gmra.mrb[0].mxu0 %v76
  %v241 = vpop.f32.mrb[0].mxu0
  %v242 = vadd.f32 %v66, %v241
  %v243 = vpop.f32.mrb[0].mxu0
  %244 = vmatprep.mubr.f32.mxu0 0.0
  %245 = vmatmul.mubr.f32.gmra.mrb[0].mxu0 %v79
  %v246 = vpop.f32.mrb[0].mxu0
  %v247 = vadd.f32 %v66, %v246
  %v248 = vpop.f32.mrb[0].mxu0
  %249 = vmatprep.mubr.f32.mxu0 0.0
  %250 = vmatmul.mubr.f32.gmra.mrb[0].mxu0 %v82
  %v251 = vpop.f32.mrb[0].mxu0
  %v252 = vadd.f32 %v66, %v251
  %v253 = vpop.f32.mrb[0].mxu0
  %254 = vmatprep.mubr.f32.mxu0 0.0
  %255 = vmatmul.mubr.f32.gmra.mrb[0].mxu0 %v85
  %v256 = vpop.f32.mrb[0].mxu0
  %v257 = vadd.f32 %v66, %v256
  %v258 = vpop.f32.mrb[0].mxu0
  %259 = vmatprep.mubr.f32.mxu0 0.0
  %260 = vmatmul.mubr.f32.gmra.mrb[0].mxu0 %v88
  %v261 = vpop.f32.mrb[0].mxu0
  %v262 = vadd.f32 %v66, %v261
  %v263 = vpop.f32.mrb[0].mxu0
  %264 = vmatprep.mubr.f32.mxu0 0.0
  %265 = vmatmul.mubr.f32.gmra.mrb[0].mxu0 %v91
  %v266 = vpop.f32.mrb[0].mxu0
  %v267 = vadd.f32 %v66, %v266
  %v268 = vpop.f32.mrb[0].mxu0
  %269 = vmatprep.mubr.f32.mxu0 0.0
  %270 = vmatmul.mubr.f32.gmra.mrb[0].mxu0 %v94
  %v271 = vpop.f32.mrb[0].mxu0
  %v272 = vadd.f32 %v66, %v271
  %v273 = vpop.f32.mrb[0].mxu0
  %274 = vmatprep.mubr.f32.mxu0 0.0
  %275 = vmatmul.mubr.f32.gmra.mrb[0].mxu0 %v97
  %v276 = vpop.f32.mrb[0].mxu0
  %v277 = vadd.f32 %v66, %v276
  %v278 = vpop.f32.mrb[0].mxu0
  %279 = vmatprep.mubr.f32.mxu0 0.0
  %280 = vmatmul.mubr.f32.gmra.mrb[0].mxu0 %v100
  %v281 = vpop.f32.mrb[0].mxu0
  %v282 = vadd.f32 %v66, %v281
  %v283 = vpop.f32.mrb[0].mxu0
  %284 = vmatprep.mubr.f32.mxu0 0.0
  %285 = vmatmul.mubr.f32.gmra.mrb[0].mxu0 %v103
  %v286 = vpop.f32.mrb[0].mxu0
  %v287 = vadd.f32 %v66, %v286
  %v288 = vpop.f32.mrb[0].mxu0
  %289 = vmatprep.mubr.f32.mxu0 0.0
  %290 = vmatmul.mubr.f32.gmra.mrb[0].mxu0 %v106
  %v291 = vpop.f32.mrb[0].mxu0
  %v292 = vadd.f32 %v66, %v291
  %v293 = vpop.f32.mrb[0].mxu0
  %294 = vmatprep.mubr.f32.mxu0 0.0
  %295 = vmatmul.mubr.f32.gmra.mrb[0].mxu0 %v109
  %v296 = vpop.f32.mrb[0].mxu0
  %v297 = vadd.f32 %v66, %v296
  %v298 = vpop.f32.mrb[0].mxu0
  %299 = vmatprep.mubr.f32.mxu0 0.0
  %300 = vmatmul.mubr.f32.gmra.mrb[0].mxu0 %v112
  %v301 = vpop.f32.mrb[0].mxu0
  %v302 = vadd.f32 %v66, %v301
  %v303 = vpop.f32.mrb[0].mxu0
  %304 = vmatprep.mubr.f32.mxu0 0.0
  %305 = vmatmul.mubr.f32.gmra.mrb[0].mxu0 %v115
  %v306 = vpop.f32.mrb[0].mxu0
  %v307 = vadd.f32 %v66, %v306
  %v308 = vpop.f32.mrb[0].mxu0
  %309 = vmatprep.mubr.f32.mxu0 0.0
  %310 = vmatmul.mubr.f32.gmra.mrb[0].mxu0 %v118
  %v311 = vpop.f32.mrb[0].mxu0
  %v312 = vadd.f32 %v66, %v311
  %v313 = vpop.f32.mrb[0].mxu0
  %314 = vmatprep.mubr.f32.mxu0 0.0
  %315 = vmatmul.mubr.f32.gmra.mrb[0].mxu0 %v121
  %v316 = vpop.f32.mrb[0].mxu0
  %v317 = vadd.f32 %v66, %v316
  %v318 = vpop.f32.mrb[0].mxu0
  %319 = vmatprep.mubr.f32.mxu0 0.0
  %320 = vmatmul.mubr.f32.gmra.mrb[0].mxu0 %v124
  %v321 = vpop.f32.mrb[0].mxu0
  %v322 = vadd.f32 %v66, %v321
  %v323 = vpop.f32.mrb[0].mxu0
  %324 = vmatprep.mubr.f32.mxu0 0.0
  %325 = vmatmul.mubr.f32.gmra.mrb[0].mxu0 %v127
  %v326 = vpop.f32.mrb[0].mxu0
  %v327 = vadd.f32 %v66, %v326
  %v328 = vpop.f32.mrb[0].mxu0
  %329 = vmatprep.mubr.f32.mxu0 0.0
  %330 = vmatmul.mubr.f32.gmra.mrb[0].mxu0 %v130
  %v331 = vpop.f32.mrb[0].mxu0
  %v332 = vadd.f32 %v66, %v331
  %v333 = vpop.f32.mrb[0].mxu0
  %334 = vmatprep.mubr.f32.mxu0 0.0
  %335 = vmatmul.mubr.f32.gmra.mrb[0].mxu0 %v133
  %v336 = vpop.f32.mrb[0].mxu0
  %v337 = vadd.f32 %v66, %v336
  %v338 = vpop.f32.mrb[0].mxu0
  %339 = vmatprep.mubr.f32.mxu0 0.0
  %340 = vmatmul.mubr.f32.gmra.mrb[0].mxu0 %v136
  %v341 = vpop.f32.mrb[0].mxu0
  %v342 = vadd.f32 %v66, %v341
  %v343 = vpop.f32.mrb[0].mxu0
  %344 = vmatprep.mubr.f32.mxu0 0.0
  %345 = vmatmul.mubr.f32.gmra.mrb[0].mxu0 %v139
  %v346 = vpop.f32.mrb[0].mxu0
  %v347 = vadd.f32 %v66, %v346
  %v348 = vpop.f32.mrb[0].mxu0
  %349 = vmatprep.mubr.f32.mxu0 0.0
  %350 = vmatmul.mubr.f32.gmra.mrb[0].mxu0 %v142
  %v351 = vpop.f32.mrb[0].mxu0
  %v352 = vadd.f32 %v66, %v351
  %v353 = vpop.f32.mrb[0].mxu0
  %354 = vmatprep.mubr.f32.mxu0 0.0
  %355 = vmatmul.mubr.f32.gmra.mrb[0].mxu0 %v145
  %v356 = vpop.f32.mrb[0].mxu0
  %v357 = vadd.f32 %v66, %v356
  %v358 = vpop.f32.mrb[0].mxu0
  %359 = vmatprep.mubr.f32.mxu0 0.0
  %360 = vmatmul.mubr.f32.gmra.mrb[0].mxu0 %v148
  %v361 = vpop.f32.mrb[0].mxu0
  %v362 = vadd.f32 %v66, %v361
  %v363 = vpop.f32.mrb[0].mxu0
  %364 = vmatprep.mubr.f32.mxu0 0.0
  %365 = vmatmul.mubr.f32.gmra.mrb[0].mxu0 %v151
  %v366 = vpop.f32.mrb[0].mxu0
  %v367 = vadd.f32 %v66, %v366
  %v368 = vpop.f32.mrb[0].mxu0
  %369 = vmatprep.mubr.f32.mxu0 0.0
  %370 = vmatmul.mubr.f32.gmra.mrb[0].mxu0 %v154
  %v371 = vpop.f32.mrb[0].mxu0
  %v372 = vadd.f32 %v66, %v371
  %v373 = vpop.f32.mrb[0].mxu0
  %374 = vmatprep.mubr.f32.mxu0 0.0
  %375 = vmatmul.mubr.f32.gmra.mrb[0].mxu0 %v157
  %v376 = vpop.f32.mrb[0].mxu0
  %v377 = vadd.f32 %v66, %v376
  %v378 = vpop.f32.mrb[0].mxu0
  %379 = vmatprep.mubr.f32.mxu0 0.0
  %380 = vmatmul.mubr.f32.gmra.mrb[0].mxu0 %v160
  %v381 = vpop.f32.mrb[0].mxu0
  %v382 = vadd.f32 %v66, %v381
  %v383 = vpop.f32.mrb[0].mxu0
  %384 = vmatprep.mubr.f32.mxu0 0.0
  %385 = vmatmul.mubr.f32.gmra.mrb[0].mxu0 %v163
  %v386 = vpop.f32.mrb[0].mxu0
  %v387 = vadd.f32 %v66, %v386
  %v388 = vpop.f32.mrb[0].mxu0
  %389 = vdwg.mxu0
  %v390 = vmax.f32 %v232, 0.0
  %v391 = vmax.f32 %v237, 0.0
  %v392 = vmax.f32 %v242, 0.0
  %v393 = vmax.f32 %v247, 0.0
  %v394 = vmax.f32 %v252, 0.0
  %v395 = vmax.f32 %v257, 0.0
  %v396 = vmax.f32 %v262, 0.0
  %v397 = vmax.f32 %v267, 0.0
  %v398 = vmax.f32 %v272, 0.0
  %v399 = vmax.f32 %v277, 0.0
  %v400 = vmax.f32 %v282, 0.0
  %v401 = vmax.f32 %v287, 0.0
  %v402 = vmax.f32 %v292, 0.0
  %v403 = vmax.f32 %v297, 0.0
  %v404 = vmax.f32 %v302, 0.0
  %v405 = vmax.f32 %v307, 0.0
  %v406 = vmax.f32 %v312, 0.0
  %v407 = vmax.f32 %v317, 0.0
  %v408 = vmax.f32 %v322, 0.0
  %v409 = vmax.f32 %v327, 0.0
  %v410 = vmax.f32 %v332, 0.0
  %v411 = vmax.f32 %v337, 0.0
  %v412 = vmax.f32 %v342, 0.0
  %v413 = vmax.f32 %v347, 0.0
  %v414 = vmax.f32 %v352, 0.0
  %v415 = vmax.f32 %v357, 0.0
  %v416 = vmax.f32 %v362, 0.0
  %v417 = vmax.f32 %v367, 0.0
  %v418 = vmax.f32 %v372, 0.0
  %v419 = vmax.f32 %v377, 0.0
  %v420 = vmax.f32 %v382, 0.0
  %v421 = vmax.f32 %v387, 0.0
  %v422 = vld [vmem:[%s3] sm:$0xff]
  %v423 = vld [vmem:[%s3 + $0x8] sm:$0xff]
  %v424 = vld [vmem:[%s3 + $0x10] sm:$0xff]
  %v425 = vld [vmem:[%s3 + $0x18] sm:$0xff]
  %v426 = vld [vmem:[%s3 + $0x20] sm:$0xff]
  %v427 = vld [vmem:[%s3 + $0x28] sm:$0xff]
  %v428 = vld [vmem:[%s3 + $0x30] sm:$0xff]
  %v429 = vld [vmem:[%s3 + $0x38] sm:$0xff]
  %v430 = vld [vmem:[%s3 + $0x40] sm:$0xff]
  %v431 = vld [vmem:[%s3 + $0x48] sm:$0xff]
  %v432 = vld [vmem:[%s3 + $0x50] sm:$0xff]
  %v433 = vld [vmem:[%s3 + $0x58] sm:$0xff]
  %v434 = vld [vmem:[%s3 + $0x60] sm:$0xff]
  %v435 = vld [vmem:[%s3 + $0x68] sm:$0xff]
  %v436 = vld [vmem:[%s3 + $0x70] sm:$0xff]
  %v437 = vld [vmem:[%s3 + $0x78] sm:$0xff]
  %v438 = vld [vmem:[%s4] sm:$0x1]
  %v440 = vlaneseq
  %v441 = vshrl.u32 %v440, 7
  %v442 = vsub.s32 0, %v441
  %v443 = vrot.slane %v438, %v442
  %445 = vmatprep.subr.mxu0 0.0
  %446 = vmatpush1.msra.mxu0 %v422
  %447 = vmatprep.subr.mxu0 0.0
  %448 = vmatpush1.msra.mxu0 %v423
  %449 = vmatprep.subr.mxu0 0.0
  %450 = vmatpush1.msra.mxu0 %v424
  %451 = vmatprep.subr.mxu0 0.0
  %452 = vmatpush1.msra.mxu0 %v425
  %453 = vmatprep.subr.mxu0 0.0
  %454 = vmatpush1.msra.mxu0 %v426
  %455 = vmatprep.subr.mxu0 0.0
  %456 = vmatpush1.msra.mxu0 %v427
  %457 = vmatprep.subr.mxu0 0.0
  %458 = vmatpush1.msra.mxu0 %v428
  %459 = vmatprep.subr.mxu0 0.0
  %460 = vmatpush1.msra.mxu0 %v429
  %461 = vmatprep.subr.mxu0 0.0
  %462 = vmatpush1.msra.mxu0 %v430
  %463 = vmatprep.subr.mxu0 0.0
  %464 = vmatpush1.msra.mxu0 %v431
  %465 = vmatprep.subr.mxu0 0.0
  %466 = vmatpush1.msra.mxu0 %v432
  %467 = vmatprep.subr.mxu0 0.0
  %468 = vmatpush1.msra.mxu0 %v433
  %469 = vmatprep.subr.mxu0 0.0
  %470 = vmatpush1.msra.mxu0 %v434
  %471 = vmatprep.subr.mxu0 0.0
  %472 = vmatpush1.msra.mxu0 %v435
  %473 = vmatprep.subr.mxu0 0.0
  %474 = vmatpush1.msra.mxu0 %v436
  %475 = vmatprep.subr.mxu0 0.0
  %476 = vmatpush1.msra.mxu0 %v437
  %477 = vmatprep.subr.mxu0 0.0
  %478 = vmatpush1.msra.mxu0 0.0
  %479 = vmatprep.subr.mxu0 0.0
  %480 = vmatpush1.msra.mxu0 0.0
  %481 = vmatprep.subr.mxu0 0.0
  %482 = vmatpush1.msra.mxu0 0.0
  %483 = vmatprep.subr.mxu0 0.0
  %484 = vmatpush1.msra.mxu0 0.0
  %485 = vmatprep.subr.mxu0 0.0
  %486 = vmatpush1.msra.mxu0 0.0
  %487 = vmatprep.subr.mxu0 0.0
  %488 = vmatpush1.msra.mxu0 0.0
  %489 = vmatprep.subr.mxu0 0.0
  %490 = vmatpush1.msra.mxu0 0.0
  %491 = vmatprep.subr.mxu0 0.0
  %492 = vmatpush1.msra.mxu0 0.0
  %493 = vmatprep.subr.mxu0 0.0
  %494 = vmatpush1.msra.mxu0 0.0
  %495 = vmatprep.subr.mxu0 0.0
  %496 = vmatpush1.msra.mxu0 0.0
  %497 = vmatprep.subr.mxu0 0.0
  %498 = vmatpush1.msra.mxu0 0.0
  %499 = vmatprep.subr.mxu0 0.0
  %500 = vmatpush1.msra.mxu0 0.0
  %501 = vmatprep.subr.mxu0 0.0
  %502 = vmatpush1.msra.mxu0 0.0
  %503 = vmatprep.subr.mxu0 0.0
  %504 = vmatpush1.msra.mxu0 0.0
  %505 = vmatprep.subr.mxu0 0.0
  %506 = vmatpush1.msra.mxu0 0.0
  %507 = vmatprep.subr.mxu0 0.0
  %508 = vmatpush1.msra.mxu0 0.0
  %509 = vmatprep.mubr.f32.mxu0 0.0
  %510 = vmatmul.mubr.f32.gmra.mrb[0].mxu0 %v390
  %v511 = vpop.f32.mrb[0].mxu0
  %v512 = vadd.f32 %v443, %v511
  %v513 = vpop.f32.mrb[0].mxu0
  %514 = vmatprep.mubr.f32.mxu0 0.0
  %515 = vmatmul.mubr.f32.gmra.mrb[0].mxu0 %v391
  %v516 = vpop.f32.mrb[0].mxu0
  %v517 = vadd.f32 %v443, %v516
  %v518 = vpop.f32.mrb[0].mxu0
  %519 = vmatprep.mubr.f32.mxu0 0.0
  %520 = vmatmul.mubr.f32.gmra.mrb[0].mxu0 %v392
  %v521 = vpop.f32.mrb[0].mxu0
  %v522 = vadd.f32 %v443, %v521
  %v523 = vpop.f32.mrb[0].mxu0
  %524 = vmatprep.mubr.f32.mxu0 0.0
  %525 = vmatmul.mubr.f32.gmra.mrb[0].mxu0 %v393
  %v526 = vpop.f32.mrb[0].mxu0
  %v527 = vadd.f32 %v443, %v526
  %v528 = vpop.f32.mrb[0].mxu0
  %529 = vmatprep.mubr.f32.mxu0 0.0
  %530 = vmatmul.mubr.f32.gmra.mrb[0].mxu0 %v394
  %v531 = vpop.f32.mrb[0].mxu0
  %v532 = vadd.f32 %v443, %v531
  %v533 = vpop.f32.mrb[0].mxu0
  %534 = vmatprep.mubr.f32.mxu0 0.0
  %535 = vmatmul.mubr.f32.gmra.mrb[0].mxu0 %v395
  %v536 = vpop.f32.mrb[0].mxu0
  %v537 = vadd.f32 %v443, %v536
  %v538 = vpop.f32.mrb[0].mxu0
  %539 = vmatprep.mubr.f32.mxu0 0.0
  %540 = vmatmul.mubr.f32.gmra.mrb[0].mxu0 %v396
  %v541 = vpop.f32.mrb[0].mxu0
  %v542 = vadd.f32 %v443, %v541
  %v543 = vpop.f32.mrb[0].mxu0
  %544 = vmatprep.mubr.f32.mxu0 0.0
  %545 = vmatmul.mubr.f32.gmra.mrb[0].mxu0 %v397
  %v546 = vpop.f32.mrb[0].mxu0
  %v547 = vadd.f32 %v443, %v546
  %v548 = vpop.f32.mrb[0].mxu0
  %549 = vmatprep.mubr.f32.mxu0 0.0
  %550 = vmatmul.mubr.f32.gmra.mrb[0].mxu0 %v398
  %v551 = vpop.f32.mrb[0].mxu0
  %v552 = vadd.f32 %v443, %v551
  %v553 = vpop.f32.mrb[0].mxu0
  %554 = vmatprep.mubr.f32.mxu0 0.0
  %555 = vmatmul.mubr.f32.gmra.mrb[0].mxu0 %v399
  %v556 = vpop.f32.mrb[0].mxu0
  %v557 = vadd.f32 %v443, %v556
  %v558 = vpop.f32.mrb[0].mxu0
  %559 = vmatprep.mubr.f32.mxu0 0.0
  %560 = vmatmul.mubr.f32.gmra.mrb[0].mxu0 %v400
  %v561 = vpop.f32.mrb[0].mxu0
  %v562 = vadd.f32 %v443, %v561
  %v563 = vpop.f32.mrb[0].mxu0
  %564 = vmatprep.mubr.f32.mxu0 0.0
  %565 = vmatmul.mubr.f32.gmra.mrb[0].mxu0 %v401
  %v566 = vpop.f32.mrb[0].mxu0
  %v567 = vadd.f32 %v443, %v566
  %v568 = vpop.f32.mrb[0].mxu0
  %569 = vmatprep.mubr.f32.mxu0 0.0
  %570 = vmatmul.mubr.f32.gmra.mrb[0].mxu0 %v402
  %v571 = vpop.f32.mrb[0].mxu0
  %v572 = vadd.f32 %v443, %v571
  %v573 = vpop.f32.mrb[0].mxu0
  %574 = vmatprep.mubr.f32.mxu0 0.0
  %575 = vmatmul.mubr.f32.gmra.mrb[0].mxu0 %v403
  %v576 = vpop.f32.mrb[0].mxu0
  %v577 = vadd.f32 %v443, %v576
  %v578 = vpop.f32.mrb[0].mxu0
  %579 = vmatprep.mubr.f32.mxu0 0.0
  %580 = vmatmul.mubr.f32.gmra.mrb[0].mxu0 %v404
  %v581 = vpop.f32.mrb[0].mxu0
  %v582 = vadd.f32 %v443, %v581
  %v583 = vpop.f32.mrb[0].mxu0
  %584 = vmatprep.mubr.f32.mxu0 0.0
  %585 = vmatmul.mubr.f32.gmra.mrb[0].mxu0 %v405
  %v586 = vpop.f32.mrb[0].mxu0
  %v587 = vadd.f32 %v443, %v586
  %v588 = vpop.f32.mrb[0].mxu0
  %589 = vmatprep.mubr.f32.mxu0 0.0
  %590 = vmatmul.mubr.f32.gmra.mrb[0].mxu0 %v406
  %v591 = vpop.f32.mrb[0].mxu0
  %v592 = vadd.f32 %v443, %v591
  %v593 = vpop.f32.mrb[0].mxu0
  %594 = vmatprep.mubr.f32.mxu0 0.0
  %595 = vmatmul.mubr.f32.gmra.mrb[0].mxu0 %v407
  %v596 = vpop.f32.mrb[0].mxu0
  %v597 = vadd.f32 %v443, %v596
  %v598 = vpop.f32.mrb[0].mxu0
  %599 = vmatprep.mubr.f32.mxu0 0.0
  %600 = vmatmul.mubr.f32.gmra.mrb[0].mxu0 %v408
  %v601 = vpop.f32.mrb[0].mxu0
  %v602 = vadd.f32 %v443, %v601
  %v603 = vpop.f32.mrb[0].mxu0
  %604 = vmatprep.mubr.f32.mxu0 0.0
  %605 = vmatmul.mubr.f32.gmra.mrb[0].mxu0 %v409
  %v606 = vpop.f32.mrb[0].mxu0
  %v607 = vadd.f32 %v443, %v606
  %v608 = vpop.f32.mrb[0].mxu0
  %609 = vmatprep.mubr.f32.mxu0 0.0
  %610 = vmatmul.mubr.f32.gmra.mrb[0].mxu0 %v410
  %v611 = vpop.f32.mrb[0].mxu0
  %v612 = vadd.f32 %v443, %v611
  %v613 = vpop.f32.mrb[0].mxu0
  %614 = vmatprep.mubr.f32.mxu0 0.0
  %615 = vmatmul.mubr.f32.gmra.mrb[0].mxu0 %v411
  %v616 = vpop.f32.mrb[0].mxu0
  %v617 = vadd.f32 %v443, %v616
  %v618 = vpop.f32.mrb[0].mxu0
  %619 = vmatprep.mubr.f32.mxu0 0.0
  %620 = vmatmul.mubr.f32.gmra.mrb[0].mxu0 %v412
  %v621 = vpop.f32.mrb[0].mxu0
  %v622 = vadd.f32 %v443, %v621
  %v623 = vpop.f32.mrb[0].mxu0
  %624 = vmatprep.mubr.f32.mxu0 0.0
  %625 = vmatmul.mubr.f32.gmra.mrb[0].mxu0 %v413
  %v626 = vpop.f32.mrb[0].mxu0
  %v627 = vadd.f32 %v443, %v626
  %v628 = vpop.f32.mrb[0].mxu0
  %629 = vmatprep.mubr.f32.mxu0 0.0
  %630 = vmatmul.mubr.f32.gmra.mrb[0].mxu0 %v414
  %v631 = vpop.f32.mrb[0].mxu0
  %v632 = vadd.f32 %v443, %v631
  %v633 = vpop.f32.mrb[0].mxu0
  %634 = vmatprep.mubr.f32.mxu0 0.0
  %635 = vmatmul.mubr.f32.gmra.mrb[0].mxu0 %v415
  %v636 = vpop.f32.mrb[0].mxu0
  %v637 = vadd.f32 %v443, %v636
  %v638 = vpop.f32.mrb[0].mxu0
  %639 = vmatprep.mubr.f32.mxu0 0.0
  %640 = vmatmul.mubr.f32.gmra.mrb[0].mxu0 %v416
  %v641 = vpop.f32.mrb[0].mxu0
  %v642 = vadd.f32 %v443, %v641
  %v643 = vpop.f32.mrb[0].mxu0
  %644 = vmatprep.mubr.f32.mxu0 0.0
  %645 = vmatmul.mubr.f32.gmra.mrb[0].mxu0 %v417
  %v646 = vpop.f32.mrb[0].mxu0
  %v647 = vadd.f32 %v443, %v646
  %v648 = vpop.f32.mrb[0].mxu0
  %649 = vmatprep.mubr.f32.mxu0 0.0
  %650 = vmatmul.mubr.f32.gmra.mrb[0].mxu0 %v418
  %v651 = vpop.f32.mrb[0].mxu0
  %v652 = vadd.f32 %v443, %v651
  %v653 = vpop.f32.mrb[0].mxu0
  %654 = vmatprep.mubr.f32.mxu0 0.0
  %655 = vmatmul.mubr.f32.gmra.mrb[0].mxu0 %v419
  %v656 = vpop.f32.mrb[0].mxu0
  %v657 = vadd.f32 %v443, %v656
  %v658 = vpop.f32.mrb[0].mxu0
  %659 = vmatprep.mubr.f32.mxu0 0.0
  %660 = vmatmul.mubr.f32.gmra.mrb[0].mxu0 %v420
  %v661 = vpop.f32.mrb[0].mxu0
  %v662 = vadd.f32 %v443, %v661
  %v663 = vpop.f32.mrb[0].mxu0
  %664 = vmatprep.mubr.f32.mxu0 0.0
  %665 = vmatmul.mubr.f32.gmra.mrb[0].mxu0 %v421
  %v666 = vpop.f32.mrb[0].mxu0
  %v667 = vadd.f32 %v443, %v666
  %v668 = vpop.f32.mrb[0].mxu0
  %669 = vdwg.mxu0
  %v670 = vmax.f32 %v512, 0.0
  %v671 = vmax.f32 %v517, 0.0
  %v672 = vmax.f32 %v522, 0.0
  %v673 = vmax.f32 %v527, 0.0
  %v674 = vmax.f32 %v532, 0.0
  %v675 = vmax.f32 %v537, 0.0
  %v676 = vmax.f32 %v542, 0.0
  %v677 = vmax.f32 %v547, 0.0
  %v678 = vmax.f32 %v552, 0.0
  %v679 = vmax.f32 %v557, 0.0
  %v680 = vmax.f32 %v562, 0.0
  %v681 = vmax.f32 %v567, 0.0
  %v682 = vmax.f32 %v572, 0.0
  %v683 = vmax.f32 %v577, 0.0
  %v684 = vmax.f32 %v582, 0.0
  %v685 = vmax.f32 %v587, 0.0
  %v686 = vmax.f32 %v592, 0.0
  %v687 = vmax.f32 %v597, 0.0
  %v688 = vmax.f32 %v602, 0.0
  %v689 = vmax.f32 %v607, 0.0
  %v690 = vmax.f32 %v612, 0.0
  %v691 = vmax.f32 %v617, 0.0
  %v692 = vmax.f32 %v622, 0.0
  %v693 = vmax.f32 %v627, 0.0
  %v694 = vmax.f32 %v632, 0.0
  %v695 = vmax.f32 %v637, 0.0
  %v696 = vmax.f32 %v642, 0.0
  %v697 = vmax.f32 %v647, 0.0
  %v698 = vmax.f32 %v652, 0.0
  %v699 = vmax.f32 %v657, 0.0
  %v700 = vmax.f32 %v662, 0.0
  %v701 = vmax.f32 %v667, 0.0
  %v702 = vld [vmem:[%s5] sm:$0xff]
  %v703 = vld [vmem:[%s5 + $0x8] sm:$0xff]
  %v704 = vld [vmem:[%s5 + $0x10] sm:$0xff]
  %v705 = vld [vmem:[%s5 + $0x18] sm:$0xff]
  %v706 = vld [vmem:[%s5 + $0x20] sm:$0xff]
  %v707 = vld [vmem:[%s5 + $0x28] sm:$0xff]
  %v708 = vld [vmem:[%s5 + $0x30] sm:$0xff]
  %v709 = vld [vmem:[%s5 + $0x38] sm:$0xff]
  %v710 = vld [vmem:[%s5 + $0x40] sm:$0xff]
  %v711 = vld [vmem:[%s5 + $0x48] sm:$0xff]
  %v712 = vld [vmem:[%s5 + $0x50] sm:$0xff]
  %v713 = vld [vmem:[%s5 + $0x58] sm:$0xff]
  %v714 = vld [vmem:[%s5 + $0x60] sm:$0xff]
  %v715 = vld [vmem:[%s5 + $0x68] sm:$0xff]
  %v716 = vld [vmem:[%s5 + $0x70] sm:$0xff]
  %v717 = vld [vmem:[%s5 + $0x78] sm:$0xff]
  %v718 = vld [vmem:[%s6] sm:$0x1]
  %v720 = vlaneseq
  %v721 = vshrl.u32 %v720, 7
  %v722 = vsub.s32 0, %v721
  %v723 = vrot.slane %v718, %v722
  %725 = vmatprep.subr.mxu0 0.0
  %726 = vmatpush1.msra.mxu0 %v702
  %727 = vmatprep.subr.mxu0 0.0
  %728 = vmatpush1.msra.mxu0 %v703
  %729 = vmatprep.subr.mxu0 0.0
  %730 = vmatpush1.msra.mxu0 %v704
  %731 = vmatprep.subr.mxu0 0.0
  %732 = vmatpush1.msra.mxu0 %v705
  %733 = vmatprep.subr.mxu0 0.0
  %734 = vmatpush1.msra.mxu0 %v706
  %735 = vmatprep.subr.mxu0 0.0
  %736 = vmatpush1.msra.mxu0 %v707
  %737 = vmatprep.subr.mxu0 0.0
  %738 = vmatpush1.msra.mxu0 %v708
  %739 = vmatprep.subr.mxu0 0.0
  %740 = vmatpush1.msra.mxu0 %v709
  %741 = vmatprep.subr.mxu0 0.0
  %742 = vmatpush1.msra.mxu0 %v710
  %743 = vmatprep.subr.mxu0 0.0
  %744 = vmatpush1.msra.mxu0 %v711
  %745 = vmatprep.subr.mxu0 0.0
  %746 = vmatpush1.msra.mxu0 %v712
  %747 = vmatprep.subr.mxu0 0.0
  %748 = vmatpush1.msra.mxu0 %v713
  %749 = vmatprep.subr.mxu0 0.0
  %750 = vmatpush1.msra.mxu0 %v714
  %751 = vmatprep.subr.mxu0 0.0
  %752 = vmatpush1.msra.mxu0 %v715
  %753 = vmatprep.subr.mxu0 0.0
  %754 = vmatpush1.msra.mxu0 %v716
  %755 = vmatprep.subr.mxu0 0.0
  %756 = vmatpush1.msra.mxu0 %v717
  %757 = vmatprep.subr.mxu0 0.0
  %758 = vmatpush1.msra.mxu0 0.0
  %759 = vmatprep.subr.mxu0 0.0
  %760 = vmatpush1.msra.mxu0 0.0
  %761 = vmatprep.subr.mxu0 0.0
  %762 = vmatpush1.msra.mxu0 0.0
  %763 = vmatprep.subr.mxu0 0.0
  %764 = vmatpush1.msra.mxu0 0.0
  %765 = vmatprep.subr.mxu0 0.0
  %766 = vmatpush1.msra.mxu0 0.0
  %767 = vmatprep.subr.mxu0 0.0
  %768 = vmatpush1.msra.mxu0 0.0
  %769 = vmatprep.subr.mxu0 0.0
  %770 = vmatpush1.msra.mxu0 0.0
  %771 = vmatprep.subr.mxu0 0.0
  %772 = vmatpush1.msra.mxu0 0.0
  %773 = vmatprep.subr.mxu0 0.0
  %774 = vmatpush1.msra.mxu0 0.0
  %775 = vmatprep.subr.mxu0 0.0
  %776 = vmatpush1.msra.mxu0 0.0
  %777 = vmatprep.subr.mxu0 0.0
  %778 = vmatpush1.msra.mxu0 0.0
  %779 = vmatprep.subr.mxu0 0.0
  %780 = vmatpush1.msra.mxu0 0.0
  %781 = vmatprep.subr.mxu0 0.0
  %782 = vmatpush1.msra.mxu0 0.0
  %783 = vmatprep.subr.mxu0 0.0
  %784 = vmatpush1.msra.mxu0 0.0
  %785 = vmatprep.subr.mxu0 0.0
  %786 = vmatpush1.msra.mxu0 0.0
  %787 = vmatprep.subr.mxu0 0.0
  %788 = vmatpush1.msra.mxu0 0.0
  %789 = vmatprep.mubr.f32.mxu0 0.0
  %790 = vmatmul.mubr.f32.gmra.mrb[0].mxu0 %v670
  %v791 = vpop.f32.mrb[0].mxu0
  %v792 = vadd.f32 %v723, %v791
  %v793 = vpop.f32.mrb[0].mxu0
  %794 = vmatprep.mubr.f32.mxu0 0.0
  %795 = vmatmul.mubr.f32.gmra.mrb[0].mxu0 %v671
  %v796 = vpop.f32.mrb[0].mxu0
  %v797 = vadd.f32 %v723, %v796
  %v798 = vpop.f32.mrb[0].mxu0
  %799 = vmatprep.mubr.f32.mxu0 0.0
  %800 = vmatmul.mubr.f32.gmra.mrb[0].mxu0 %v672
  %v801 = vpop.f32.mrb[0].mxu0
  %v802 = vadd.f32 %v723, %v801
  %v803 = vpop.f32.mrb[0].mxu0
  %804 = vmatprep.mubr.f32.mxu0 0.0
  %805 = vmatmul.mubr.f32.gmra.mrb[0].mxu0 %v673
  %v806 = vpop.f32.mrb[0].mxu0
  %v807 = vadd.f32 %v723, %v806
  %v808 = vpop.f32.mrb[0].mxu0
  %809 = vmatprep.mubr.f32.mxu0 0.0
  %810 = vmatmul.mubr.f32.gmra.mrb[0].mxu0 %v674
  %v811 = vpop.f32.mrb[0].mxu0
  %v812 = vadd.f32 %v723, %v811
  %v813 = vpop.f32.mrb[0].mxu0
  %814 = vmatprep.mubr.f32.mxu0 0.0
  %815 = vmatmul.mubr.f32.gmra.mrb[0].mxu0 %v675
  %v816 = vpop.f32.mrb[0].mxu0
  %v817 = vadd.f32 %v723, %v816
  %v818 = vpop.f32.mrb[0].mxu0
  %819 = vmatprep.mubr.f32.mxu0 0.0
  %820 = vmatmul.mubr.f32.gmra.mrb[0].mxu0 %v676
  %v821 = vpop.f32.mrb[0].mxu0
  %v822 = vadd.f32 %v723, %v821
  %v823 = vpop.f32.mrb[0].mxu0
  %824 = vmatprep.mubr.f32.mxu0 0.0
  %825 = vmatmul.mubr.f32.gmra.mrb[0].mxu0 %v677
  %v826 = vpop.f32.mrb[0].mxu0
  %v827 = vadd.f32 %v723, %v826
  %v828 = vpop.f32.mrb[0].mxu0
  %829 = vmatprep.mubr.f32.mxu0 0.0
  %830 = vmatmul.mubr.f32.gmra.mrb[0].mxu0 %v678
  %v831 = vpop.f32.mrb[0].mxu0
  %v832 = vadd.f32 %v723, %v831
  %v833 = vpop.f32.mrb[0].mxu0
  %834 = vmatprep.mubr.f32.mxu0 0.0
  %835 = vmatmul.mubr.f32.gmra.mrb[0].mxu0 %v679
  %v836 = vpop.f32.mrb[0].mxu0
  %v837 = vadd.f32 %v723, %v836
  %v838 = vpop.f32.mrb[0].mxu0
  %839 = vmatprep.mubr.f32.mxu0 0.0
  %840 = vmatmul.mubr.f32.gmra.mrb[0].mxu0 %v680
  %v841 = vpop.f32.mrb[0].mxu0
  %v842 = vadd.f32 %v723, %v841
  %v843 = vpop.f32.mrb[0].mxu0
  %844 = vmatprep.mubr.f32.mxu0 0.0
  %845 = vmatmul.mubr.f32.gmra.mrb[0].mxu0 %v681
  %v846 = vpop.f32.mrb[0].mxu0
  %v847 = vadd.f32 %v723, %v846
  %v848 = vpop.f32.mrb[0].mxu0
  %849 = vmatprep.mubr.f32.mxu0 0.0
  %850 = vmatmul.mubr.f32.gmra.mrb[0].mxu0 %v682
  %v851 = vpop.f32.mrb[0].mxu0
  %v852 = vadd.f32 %v723, %v851
  %v853 = vpop.f32.mrb[0].mxu0
  %854 = vmatprep.mubr.f32.mxu0 0.0
  %855 = vmatmul.mubr.f32.gmra.mrb[0].mxu0 %v683
  %v856 = vpop.f32.mrb[0].mxu0
  %v857 = vadd.f32 %v723, %v856
  %v858 = vpop.f32.mrb[0].mxu0
  %859 = vmatprep.mubr.f32.mxu0 0.0
  %860 = vmatmul.mubr.f32.gmra.mrb[0].mxu0 %v684
  %v861 = vpop.f32.mrb[0].mxu0
  %v862 = vadd.f32 %v723, %v861
  %v863 = vpop.f32.mrb[0].mxu0
  %864 = vmatprep.mubr.f32.mxu0 0.0
  %865 = vmatmul.mubr.f32.gmra.mrb[0].mxu0 %v685
  %v866 = vpop.f32.mrb[0].mxu0
  %v867 = vadd.f32 %v723, %v866
  %v868 = vpop.f32.mrb[0].mxu0
  %869 = vmatprep.mubr.f32.mxu0 0.0
  %870 = vmatmul.mubr.f32.gmra.mrb[0].mxu0 %v686
  %v871 = vpop.f32.mrb[0].mxu0
  %v872 = vadd.f32 %v723, %v871
  %v873 = vpop.f32.mrb[0].mxu0
  %874 = vmatprep.mubr.f32.mxu0 0.0
  %875 = vmatmul.mubr.f32.gmra.mrb[0].mxu0 %v687
  %v876 = vpop.f32.mrb[0].mxu0
  %v877 = vadd.f32 %v723, %v876
  %v878 = vpop.f32.mrb[0].mxu0
  %879 = vmatprep.mubr.f32.mxu0 0.0
  %880 = vmatmul.mubr.f32.gmra.mrb[0].mxu0 %v688
  %v881 = vpop.f32.mrb[0].mxu0
  %v882 = vadd.f32 %v723, %v881
  %v883 = vpop.f32.mrb[0].mxu0
  %884 = vmatprep.mubr.f32.mxu0 0.0
  %885 = vmatmul.mubr.f32.gmra.mrb[0].mxu0 %v689
  %v886 = vpop.f32.mrb[0].mxu0
  %v887 = vadd.f32 %v723, %v886
  %v888 = vpop.f32.mrb[0].mxu0
  %889 = vmatprep.mubr.f32.mxu0 0.0
  %890 = vmatmul.mubr.f32.gmra.mrb[0].mxu0 %v690
  %v891 = vpop.f32.mrb[0].mxu0
  %v892 = vadd.f32 %v723, %v891
  %v893 = vpop.f32.mrb[0].mxu0
  %894 = vmatprep.mubr.f32.mxu0 0.0
  %895 = vmatmul.mubr.f32.gmra.mrb[0].mxu0 %v691
  %v896 = vpop.f32.mrb[0].mxu0
  %v897 = vadd.f32 %v723, %v896
  %v898 = vpop.f32.mrb[0].mxu0
  %899 = vmatprep.mubr.f32.mxu0 0.0
  %900 = vmatmul.mubr.f32.gmra.mrb[0].mxu0 %v692
  %v901 = vpop.f32.mrb[0].mxu0
  %v902 = vadd.f32 %v723, %v901
  %v903 = vpop.f32.mrb[0].mxu0
  %904 = vmatprep.mubr.f32.mxu0 0.0
  %905 = vmatmul.mubr.f32.gmra.mrb[0].mxu0 %v693
  %v906 = vpop.f32.mrb[0].mxu0
  %v907 = vadd.f32 %v723, %v906
  %v908 = vpop.f32.mrb[0].mxu0
  %909 = vmatprep.mubr.f32.mxu0 0.0
  %910 = vmatmul.mubr.f32.gmra.mrb[0].mxu0 %v694
  %v911 = vpop.f32.mrb[0].mxu0
  %v912 = vadd.f32 %v723, %v911
  %v913 = vpop.f32.mrb[0].mxu0
  %914 = vmatprep.mubr.f32.mxu0 0.0
  %915 = vmatmul.mubr.f32.gmra.mrb[0].mxu0 %v695
  %v916 = vpop.f32.mrb[0].mxu0
  %v917 = vadd.f32 %v723, %v916
  %v918 = vpop.f32.mrb[0].mxu0
  %919 = vmatprep.mubr.f32.mxu0 0.0
  %920 = vmatmul.mubr.f32.gmra.mrb[0].mxu0 %v696
  %v921 = vpop.f32.mrb[0].mxu0
  %v922 = vadd.f32 %v723, %v921
  %v923 = vpop.f32.mrb[0].mxu0
  %924 = vmatprep.mubr.f32.mxu0 0.0
  %925 = vmatmul.mubr.f32.gmra.mrb[0].mxu0 %v697
  %v926 = vpop.f32.mrb[0].mxu0
  %v927 = vadd.f32 %v723, %v926
  %v928 = vpop.f32.mrb[0].mxu0
  %929 = vmatprep.mubr.f32.mxu0 0.0
  %930 = vmatmul.mubr.f32.gmra.mrb[0].mxu0 %v698
  %v931 = vpop.f32.mrb[0].mxu0
  %v932 = vadd.f32 %v723, %v931
  %v933 = vpop.f32.mrb[0].mxu0
  %934 = vmatprep.mubr.f32.mxu0 0.0
  %935 = vmatmul.mubr.f32.gmra.mrb[0].mxu0 %v699
  %v936 = vpop.f32.mrb[0].mxu0
  %v937 = vadd.f32 %v723, %v936
  %v938 = vpop.f32.mrb[0].mxu0
  %939 = vmatprep.mubr.f32.mxu0 0.0
  %940 = vmatmul.mubr.f32.gmra.mrb[0].mxu0 %v700
  %v941 = vpop.f32.mrb[0].mxu0
  %v942 = vadd.f32 %v723, %v941
  %v943 = vpop.f32.mrb[0].mxu0
  %944 = vmatprep.mubr.f32.mxu0 0.0
  %945 = vmatmul.mubr.f32.gmra.mrb[0].mxu0 %v701
  %v946 = vpop.f32.mrb[0].mxu0
  %v947 = vadd.f32 %v723, %v946
  %v948 = vpop.f32.mrb[0].mxu0
  %949 = vdwg.mxu0
  %950 = vst [vmem:[%s7] sm:$0xff] %v792
  %951 = vst [vmem:[%s7 + $0x8] sm:$0xff] %v797
  %952 = vst [vmem:[%s7 + $0x10] sm:$0xff] %v802
  %953 = vst [vmem:[%s7 + $0x18] sm:$0xff] %v807
  %954 = vst [vmem:[%s7 + $0x20] sm:$0xff] %v812
  %955 = vst [vmem:[%s7 + $0x28] sm:$0xff] %v817
  %956 = vst [vmem:[%s7 + $0x30] sm:$0xff] %v822
  %957 = vst [vmem:[%s7 + $0x38] sm:$0xff] %v827
  %958 = vst [vmem:[%s7 + $0x40] sm:$0xff] %v832
  %959 = vst [vmem:[%s7 + $0x48] sm:$0xff] %v837
  %960 = vst [vmem:[%s7 + $0x50] sm:$0xff] %v842
  %961 = vst [vmem:[%s7 + $0x58] sm:$0xff] %v847
  %962 = vst [vmem:[%s7 + $0x60] sm:$0xff] %v852
  %963 = vst [vmem:[%s7 + $0x68] sm:$0xff] %v857
  %964 = vst [vmem:[%s7 + $0x70] sm:$0xff] %v862
  %965 = vst [vmem:[%s7 + $0x78] sm:$0xff] %v867
  %966 = vst [vmem:[%s7 + $0x80] sm:$0xff] %v872
  %967 = vst [vmem:[%s7 + $0x88] sm:$0xff] %v877
  %968 = vst [vmem:[%s7 + $0x90] sm:$0xff] %v882
  %969 = vst [vmem:[%s7 + $0x98] sm:$0xff] %v887
  %970 = vst [vmem:[%s7 + $0xa0] sm:$0xff] %v892
  %971 = vst [vmem:[%s7 + $0xa8] sm:$0xff] %v897
  %972 = vst [vmem:[%s7 + $0xb0] sm:$0xff] %v902
  %973 = vst [vmem:[%s7 + $0xb8] sm:$0xff] %v907
  %974 = vst [vmem:[%s7 + $0xc0] sm:$0xff] %v912
  %975 = vst [vmem:[%s7 + $0xc8] sm:$0xff] %v917
  %976 = vst [vmem:[%s7 + $0xd0] sm:$0xff] %v922
  %977 = vst [vmem:[%s7 + $0xd8] sm:$0xff] %v927
  %978 = vst [vmem:[%s7 + $0xe0] sm:$0xff] %v932
  %979 = vst [vmem:[%s7 + $0xe8] sm:$0xff] %v937
  %980 = vst [vmem:[%s7 + $0xf0] sm:$0xff] %v942
  %981 = vst [vmem:[%s7 + $0xf8] sm:$0xff] %v947
  %1014 = vrot.lane.b32.xlu0 %v792, 1
  %v1015 = vpop.permute.xlu0 %1014
  %1016 = vrot.lane.b32.xlu0 %v797, 1
  %v1017 = vpop.permute.xlu0 %1016
  %1018 = vrot.lane.b32.xlu0 %v802, 1
  %v1019 = vpop.permute.xlu0 %1018
  %1020 = vrot.lane.b32.xlu0 %v807, 1
  %v1021 = vpop.permute.xlu0 %1020
  %1022 = vrot.lane.b32.xlu0 %v812, 1
  %v1023 = vpop.permute.xlu0 %1022
  %1024 = vrot.lane.b32.xlu0 %v817, 1
  %v1025 = vpop.permute.xlu0 %1024
  %1026 = vrot.lane.b32.xlu0 %v822, 1
  %v1027 = vpop.permute.xlu0 %1026
  %1028 = vrot.lane.b32.xlu0 %v827, 1
  %v1029 = vpop.permute.xlu0 %1028
  %1030 = vrot.lane.b32.xlu0 %v832, 1
  %v1031 = vpop.permute.xlu0 %1030
  %1032 = vrot.lane.b32.xlu0 %v837, 1
  %v1033 = vpop.permute.xlu0 %1032
  %1034 = vrot.lane.b32.xlu0 %v842, 1
  %v1035 = vpop.permute.xlu0 %1034
  %1036 = vrot.lane.b32.xlu0 %v847, 1
  %v1037 = vpop.permute.xlu0 %1036
  %1038 = vrot.lane.b32.xlu0 %v852, 1
  %v1039 = vpop.permute.xlu0 %1038
  %1040 = vrot.lane.b32.xlu0 %v857, 1
  %v1041 = vpop.permute.xlu0 %1040
  %1042 = vrot.lane.b32.xlu0 %v862, 1
  %v1043 = vpop.permute.xlu0 %1042
  %1044 = vrot.lane.b32.xlu0 %v867, 1
  %v1045 = vpop.permute.xlu0 %1044
  %1046 = vrot.lane.b32.xlu0 %v872, 1
  %v1047 = vpop.permute.xlu0 %1046
  %1048 = vrot.lane.b32.xlu0 %v877, 1
  %v1049 = vpop.permute.xlu0 %1048
  %1050 = vrot.lane.b32.xlu0 %v882, 1
  %v1051 = vpop.permute.xlu0 %1050
  %1052 = vrot.lane.b32.xlu0 %v887, 1
  %v1053 = vpop.permute.xlu0 %1052
  %1054 = vrot.lane.b32.xlu0 %v892, 1
  %v1055 = vpop.permute.xlu0 %1054
  %1056 = vrot.lane.b32.xlu0 %v897, 1
  %v1057 = vpop.permute.xlu0 %1056
  %1058 = vrot.lane.b32.xlu0 %v902, 1
  %v1059 = vpop.permute.xlu0 %1058
  %1060 = vrot.lane.b32.xlu0 %v907, 1
  %v1061 = vpop.permute.xlu0 %1060
  %1062 = vrot.lane.b32.xlu0 %v912, 1
  %v1063 = vpop.permute.xlu0 %1062
  %1064 = vrot.lane.b32.xlu0 %v917, 1
  %v1065 = vpop.permute.xlu0 %1064
  %1066 = vrot.lane.b32.xlu0 %v922, 1
  %v1067 = vpop.permute.xlu0 %1066
  %1068 = vrot.lane.b32.xlu0 %v927, 1
  %v1069 = vpop.permute.xlu0 %1068
  %1070 = vrot.lane.b32.xlu0 %v932, 1
  %v1071 = vpop.permute.xlu0 %1070
  %1072 = vrot.lane.b32.xlu0 %v937, 1
  %v1073 = vpop.permute.xlu0 %1072
  %1074 = vrot.lane.b32.xlu0 %v942, 1
  %v1075 = vpop.permute.xlu0 %1074
  %1076 = vrot.lane.b32.xlu0 %v947, 1
  %v1077 = vpop.permute.xlu0 %1076
  %vm1110 = vcmp.gt.f32.partialorder %v792, %v1015
  %vm1111 = vcmp.gt.f32.partialorder %v797, %v1017
  %vm1112 = vcmp.gt.f32.partialorder %v802, %v1019
  %vm1113 = vcmp.gt.f32.partialorder %v807, %v1021
  %vm1114 = vcmp.gt.f32.partialorder %v812, %v1023
  %vm1115 = vcmp.gt.f32.partialorder %v817, %v1025
  %vm1116 = vcmp.gt.f32.partialorder %v822, %v1027
  %vm1117 = vcmp.gt.f32.partialorder %v827, %v1029
  %vm1118 = vcmp.gt.f32.partialorder %v832, %v1031
  %vm1119 = vcmp.gt.f32.partialorder %v837, %v1033
  %vm1120 = vcmp.gt.f32.partialorder %v842, %v1035
  %vm1121 = vcmp.gt.f32.partialorder %v847, %v1037
  %vm1122 = vcmp.gt.f32.partialorder %v852, %v1039
  %vm1123 = vcmp.gt.f32.partialorder %v857, %v1041
  %vm1124 = vcmp.gt.f32.partialorder %v862, %v1043
  %vm1125 = vcmp.gt.f32.partialorder %v867, %v1045
  %vm1126 = vcmp.gt.f32.partialorder %v872, %v1047
  %vm1127 = vcmp.gt.f32.partialorder %v877, %v1049
  %vm1128 = vcmp.gt.f32.partialorder %v882, %v1051
  %vm1129 = vcmp.gt.f32.partialorder %v887, %v1053
  %vm1130 = vcmp.gt.f32.partialorder %v892, %v1055
  %vm1131 = vcmp.gt.f32.partialorder %v897, %v1057
  %vm1132 = vcmp.gt.f32.partialorder %v902, %v1059
  %vm1133 = vcmp.gt.f32.partialorder %v907, %v1061
  %vm1134 = vcmp.gt.f32.partialorder %v912, %v1063
  %vm1135 = vcmp.gt.f32.partialorder %v917, %v1065
  %vm1136 = vcmp.gt.f32.partialorder %v922, %v1067
  %vm1137 = vcmp.gt.f32.partialorder %v927, %v1069
  %vm1138 = vcmp.gt.f32.partialorder %v932, %v1071
  %vm1139 = vcmp.gt.f32.partialorder %v937, %v1073
  %vm1140 = vcmp.gt.f32.partialorder %v942, %v1075
  %vm1141 = vcmp.gt.f32.partialorder %v947, %v1077
  %v1142 = vsel %vm1110, 1, 0
  %v1143 = vsel %vm1111, 1, 0
  %v1144 = vsel %vm1112, 1, 0
  %v1145 = vsel %vm1113, 1, 0
  %v1146 = vsel %vm1114, 1, 0
  %v1147 = vsel %vm1115, 1, 0
  %v1148 = vsel %vm1116, 1, 0
  %v1149 = vsel %vm1117, 1, 0
  %v1150 = vsel %vm1118, 1, 0
  %v1151 = vsel %vm1119, 1, 0
  %v1152 = vsel %vm1120, 1, 0
  %v1153 = vsel %vm1121, 1, 0
  %v1154 = vsel %vm1122, 1, 0
  %v1155 = vsel %vm1123, 1, 0
  %v1156 = vsel %vm1124, 1, 0
  %v1157 = vsel %vm1125, 1, 0
  %v1158 = vsel %vm1126, 1, 0
  %v1159 = vsel %vm1127, 1, 0
  %v1160 = vsel %vm1128, 1, 0
  %v1161 = vsel %vm1129, 1, 0
  %v1162 = vsel %vm1130, 1, 0
  %v1163 = vsel %vm1131, 1, 0
  %v1164 = vsel %vm1132, 1, 0
  %v1165 = vsel %vm1133, 1, 0
  %v1166 = vsel %vm1134, 1, 0
  %v1167 = vsel %vm1135, 1, 0
  %v1168 = vsel %vm1136, 1, 0
  %v1169 = vsel %vm1137, 1, 0
  %v1170 = vsel %vm1138, 1, 0
  %v1171 = vsel %vm1139, 1, 0
  %v1172 = vsel %vm1140, 1, 0
  %v1173 = vsel %vm1141, 1, 0
  %1174 = vrot.lane.b32.xlu0 %v1142, 127
  %v1175 = vpop.permute.xlu0 %1174
  %1176 = vrot.lane.b32.xlu0 %v1143, 127
  %v1177 = vpop.permute.xlu0 %1176
  %1178 = vrot.lane.b32.xlu0 %v1144, 127
  %v1179 = vpop.permute.xlu0 %1178
  %1180 = vrot.lane.b32.xlu0 %v1145, 127
  %v1181 = vpop.permute.xlu0 %1180
  %1182 = vrot.lane.b32.xlu0 %v1146, 127
  %v1183 = vpop.permute.xlu0 %1182
  %1184 = vrot.lane.b32.xlu0 %v1147, 127
  %v1185 = vpop.permute.xlu0 %1184
  %1186 = vrot.lane.b32.xlu0 %v1148, 127
  %v1187 = vpop.permute.xlu0 %1186
  %1188 = vrot.lane.b32.xlu0 %v1149, 127
  %v1189 = vpop.permute.xlu0 %1188
  %1190 = vrot.lane.b32.xlu0 %v1150, 127
  %v1191 = vpop.permute.xlu0 %1190
  %1192 = vrot.lane.b32.xlu0 %v1151, 127
  %v1193 = vpop.permute.xlu0 %1192
  %1194 = vrot.lane.b32.xlu0 %v1152, 127
  %v1195 = vpop.permute.xlu0 %1194
  %1196 = vrot.lane.b32.xlu0 %v1153, 127
  %v1197 = vpop.permute.xlu0 %1196
  %1198 = vrot.lane.b32.xlu0 %v1154, 127
  %v1199 = vpop.permute.xlu0 %1198
  %1200 = vrot.lane.b32.xlu0 %v1155, 127
  %v1201 = vpop.permute.xlu0 %1200
  %1202 = vrot.lane.b32.xlu0 %v1156, 127
  %v1203 = vpop.permute.xlu0 %1202
  %1204 = vrot.lane.b32.xlu0 %v1157, 127
  %v1205 = vpop.permute.xlu0 %1204
  %1206 = vrot.lane.b32.xlu0 %v1158, 127
  %v1207 = vpop.permute.xlu0 %1206
  %1208 = vrot.lane.b32.xlu0 %v1159, 127
  %v1209 = vpop.permute.xlu0 %1208
  %1210 = vrot.lane.b32.xlu0 %v1160, 127
  %v1211 = vpop.permute.xlu0 %1210
  %1212 = vrot.lane.b32.xlu0 %v1161, 127
  %v1213 = vpop.permute.xlu0 %1212
  %1214 = vrot.lane.b32.xlu0 %v1162, 127
  %v1215 = vpop.permute.xlu0 %1214
  %1216 = vrot.lane.b32.xlu0 %v1163, 127
  %v1217 = vpop.permute.xlu0 %1216
  %1218 = vrot.lane.b32.xlu0 %v1164, 127
  %v1219 = vpop.permute.xlu0 %1218
  %1220 = vrot.lane.b32.xlu0 %v1165, 127
  %v1221 = vpop.permute.xlu0 %1220
  %1222 = vrot.lane.b32.xlu0 %v1166, 127
  %v1223 = vpop.permute.xlu0 %1222
  %1224 = vrot.lane.b32.xlu0 %v1167, 127
  %v1225 = vpop.permute.xlu0 %1224
  %1226 = vrot.lane.b32.xlu0 %v1168, 127
  %v1227 = vpop.permute.xlu0 %1226
  %1228 = vrot.lane.b32.xlu0 %v1169, 127
  %v1229 = vpop.permute.xlu0 %1228
  %1230 = vrot.lane.b32.xlu0 %v1170, 127
  %v1231 = vpop.permute.xlu0 %1230
  %1232 = vrot.lane.b32.xlu0 %v1171, 127
  %v1233 = vpop.permute.xlu0 %1232
  %1234 = vrot.lane.b32.xlu0 %v1172, 127
  %v1235 = vpop.permute.xlu0 %1234
  %1236 = vrot.lane.b32.xlu0 %v1173, 127
  %v1237 = vpop.permute.xlu0 %1236
  %vm1238 = vcmask 7168
  %1239 = vst.msk [vmem:[%s8] sm:$0xff] %vm1238, %v1175
  %1240 = vst.msk [vmem:[%s8 + $0x8] sm:$0xff] %vm1238, %v1177
  %1241 = vst.msk [vmem:[%s8 + $0x10] sm:$0xff] %vm1238, %v1179
  %1242 = vst.msk [vmem:[%s8 + $0x18] sm:$0xff] %vm1238, %v1181
  %1243 = vst.msk [vmem:[%s8 + $0x20] sm:$0xff] %vm1238, %v1183
  %1244 = vst.msk [vmem:[%s8 + $0x28] sm:$0xff] %vm1238, %v1185
  %1245 = vst.msk [vmem:[%s8 + $0x30] sm:$0xff] %vm1238, %v1187
  %1246 = vst.msk [vmem:[%s8 + $0x38] sm:$0xff] %vm1238, %v1189
  %1247 = vst.msk [vmem:[%s8 + $0x40] sm:$0xff] %vm1238, %v1191
  %1248 = vst.msk [vmem:[%s8 + $0x48] sm:$0xff] %vm1238, %v1193
  %1249 = vst.msk [vmem:[%s8 + $0x50] sm:$0xff] %vm1238, %v1195
  %1250 = vst.msk [vmem:[%s8 + $0x58] sm:$0xff] %vm1238, %v1197
  %1251 = vst.msk [vmem:[%s8 + $0x60] sm:$0xff] %vm1238, %v1199
  %1252 = vst.msk [vmem:[%s8 + $0x68] sm:$0xff] %vm1238, %v1201
  %1253 = vst.msk [vmem:[%s8 + $0x70] sm:$0xff] %vm1238, %v1203
  %1254 = vst.msk [vmem:[%s8 + $0x78] sm:$0xff] %vm1238, %v1205
  %1255 = vst.msk [vmem:[%s8 + $0x80] sm:$0xff] %vm1238, %v1207
  %1256 = vst.msk [vmem:[%s8 + $0x88] sm:$0xff] %vm1238, %v1209
  %1257 = vst.msk [vmem:[%s8 + $0x90] sm:$0xff] %vm1238, %v1211
  %1258 = vst.msk [vmem:[%s8 + $0x98] sm:$0xff] %vm1238, %v1213
  %1259 = vst.msk [vmem:[%s8 + $0xa0] sm:$0xff] %vm1238, %v1215
  %1260 = vst.msk [vmem:[%s8 + $0xa8] sm:$0xff] %vm1238, %v1217
  %1261 = vst.msk [vmem:[%s8 + $0xb0] sm:$0xff] %vm1238, %v1219
  %1262 = vst.msk [vmem:[%s8 + $0xb8] sm:$0xff] %vm1238, %v1221
  %1263 = vst.msk [vmem:[%s8 + $0xc0] sm:$0xff] %vm1238, %v1223
  %1264 = vst.msk [vmem:[%s8 + $0xc8] sm:$0xff] %vm1238, %v1225
  %1265 = vst.msk [vmem:[%s8 + $0xd0] sm:$0xff] %vm1238, %v1227
  %1266 = vst.msk [vmem:[%s8 + $0xd8] sm:$0xff] %vm1238, %v1229
  %1267 = vst.msk [vmem:[%s8 + $0xe0] sm:$0xff] %vm1238, %v1231
  %1268 = vst.msk [vmem:[%s8 + $0xe8] sm:$0xff] %vm1238, %v1233
  %1269 = vst.msk [vmem:[%s8 + $0xf0] sm:$0xff] %vm1238, %v1235
  %1270 = vst.msk [vmem:[%s8 + $0xf8] sm:$0xff] %vm1238, %v1237
  // Predicated region
  $region30: #{_lambda_.1} parent=0 // pred_check
    _
  $region31: #{_lambda_.1} parent=0 // pred_check_branch
    %1272 = sbr.rel (0) target = $region33
  $region32: #{_lambda_.1} parent=0 // pred_region
    _
  $region33: #{_lambda_.1} parent=0 // pred_fallthru
    _
  // Predicated region
  $region34: #{_lambda_.1} parent=0 // pred_check
    _
  $region35: #{_lambda_.1} parent=0 // pred_check_branch
    %1274 = sbr.rel (0) target = $region37
  $region36: #{_lambda_.1} parent=0 // pred_region
    _
  $region37: #{_lambda_.1} parent=0 // pred_fallthru
    _
  // Predicated region
  $region38: #{_lambda_.1} parent=0 // pred_check
    _
  $region39: #{_lambda_.1} parent=0 // pred_check_branch
    %1276 = sbr.rel (0) target = $region41
  $region40: #{_lambda_.1} parent=0 // pred_region
    _
  $region41: #{_lambda_.1} parent=0 // pred_fallthru
    _
  // Predicated region
  $region42: #{_lambda_.1} parent=0 // pred_check
    _
  $region43: #{_lambda_.1} parent=0 // pred_check_branch
    %1278 = sbr.rel (0) target = $region45
  $region44: #{_lambda_.1} parent=0 // pred_region
    _
  $region45: #{_lambda_.1} parent=0 // pred_fallthru
    _

</llo_original>
